<compile_context>
chip_gen: v5e
topology: v5e:2x2
jax: 0.10.0
libtpu: 0.0.40
codegen_flags: <defaults>
</compile_context>

<pallas_src>
import functools

import jax
import jax.numpy as jnp
from jax.experimental import pallas as pl
from jax.experimental.pallas import tpu as pltpu

BN_EPS = 1e-5
LANE = 128


def _round_up(n, m=LANE):
    return ((n + m - 1) // m) * m


def _bn_relu(h, gamma, beta):
    # h: [B, F] f32 (full batch resident), gamma/beta: [1, F] f32.
    # Training-mode BatchNorm1d + ReLU, folded into per-feature scale/shift.
    # Zero-padded feature columns stay exactly zero:
    #   h==0 -> mean==0 -> shift = beta - 0 = 0 -> y = 0 -> relu(0) = 0.
    mean = jnp.mean(h, axis=0, keepdims=True)
    var = jnp.mean((h - mean) ** 2, axis=0, keepdims=True)  # biased variance
    inv = jax.lax.rsqrt(var + BN_EPS)
    scale = inv * gamma                       # [1, F]
    shift = beta - mean * scale               # [1, F]
    return jnp.maximum(h * scale + shift, 0.0)


def mlp_kernel(x_ref, w_ref, p_ref, out_ref, *, in_p, wp):
    # Static row offsets into the packed bf16 weight buffer. All are multiples
    # of 128 (hence of the 16-row bf16 sublane tile), so slices are free views.
    o1 = in_p
    o2 = o1 + wp
    o3 = o2 + wp
    o4 = o3 + wp

    # Packed per-feature params: one [8, WP] f32 block (single vreg-sized DMA).
    g1, be1 = p_ref[0:1, :], p_ref[1:2, :]
    g2, be2 = p_ref[2:3, :], p_ref[3:4, :]
    g3, be3 = p_ref[4:5, :], p_ref[5:6, :]
    b4 = p_ref[6:7, :]

    # bf16 operands into each MXU matmul, f32 accumulation, f32 BN/ReLU.
    x = x_ref[...].astype(jnp.bfloat16)

    h = jnp.dot(x, w_ref[0:o1, :], preferred_element_type=jnp.float32)
    h = _bn_relu(h, g1, be1)

    h = jnp.dot(h.astype(jnp.bfloat16), w_ref[o1:o2, :],
                preferred_element_type=jnp.float32)
    h = _bn_relu(h, g2, be2)

    h = jnp.dot(h.astype(jnp.bfloat16), w_ref[o2:o3, :],
                preferred_element_type=jnp.float32)
    h = _bn_relu(h, g3, be3)

    h = jnp.dot(h.astype(jnp.bfloat16), w_ref[o3:o4, :],
                preferred_element_type=jnp.float32) + b4
    out_ref[...] = h.astype(out_ref.dtype)


@functools.partial(jax.jit, static_argnames=("out_dim",))
def net_forward(x, w_packed, p_packed, out_dim):
    B = x.shape[0]
    wp = w_packed.shape[1]                # common padded feature width
    in_p = w_packed.shape[0] - 3 * wp     # padded input width

    # Lane-dense input: pad x's last dim to in_p (zeros match w1's zero rows).
    if x.shape[1] != in_p:
        x = jnp.pad(x, ((0, 0), (0, in_p - x.shape[1])))

    args = (x, w_packed, p_packed)

    # Advisory cost hint: this kernel is tiny (~1 MFLOP); let XLA schedule it
    # as cheap instead of as an opaque expensive custom call.
    flops = 2 * B * (in_p * wp + 3 * wp * wp)
    bytes_accessed = (sum(int(a.size) * a.dtype.itemsize for a in args)
                      + B * wp * 4)
    cost = pl.CostEstimate(flops=flops, transcendentals=3 * wp,
                           bytes_accessed=bytes_accessed)

    kernel = functools.partial(mlp_kernel, in_p=in_p, wp=wp)

    # Single grid point: all weights (+ full batch of activations) fit in well
    # under 1 MiB of VMEM, and training-mode BN needs full-batch statistics.
    # memory_space-only BlockSpecs = whole-array blocks, one DMA per argument
    # (3 inputs total after packing).
    # TODO(synk): for large B, tile the batch on a 'parallel' grid axis (or
    #   core_map over v7x's 2 TCs) with a two-pass streaming sum/sumsq BN
    #   reduction, and raise vmem_limit_bytes per generation (<=~48 MiB v7x,
    #   up to ~100 MiB v5e/v6e).
    # TODO(synk): if called in a loop, keep w_packed resident across calls
    #   (cross-call prefetch) instead of re-DMAing it every invocation.
    out_padded = pl.pallas_call(
        kernel,
        out_shape=jax.ShapeDtypeStruct((B, wp), jnp.float32),
        in_specs=[pl.BlockSpec(memory_space=pltpu.MemorySpace.VMEM)
                  for _ in args],
        out_specs=pl.BlockSpec(memory_space=pltpu.MemorySpace.VMEM),
        compiler_params=pltpu.CompilerParams(vmem_limit_bytes=16 << 20),
        cost_estimate=cost,
    )(*args)
    return out_padded[:, :out_dim]


def init_params(key, in_dim, h1, h2, h3, out_dim):
    """PyTorch-default-style init, packed for the kernel:
      - w_packed: bf16 [in_p + 3*WP, WP], rows = [W1; W2; W3; W4], each weight
        pre-transposed to [in, out] and zero-padded to the common width WP.
      - p_packed: f32 [8, WP], rows = [g1, be1, g2, be2, g3, be3, b4, 0].
    Pre-BN biases omitted (exact no-op under training-mode BN)."""
    wp = max(_round_up(d) for d in (h1, h2, h3, out_dim))
    in_p = _round_up(in_dim)

    def linear_w(k, fan_in, fan_out, pad_in):
        bound = 1.0 / (fan_in ** 0.5)
        w = jax.random.uniform(k, (fan_in, fan_out), jnp.float32, -bound, bound)
        return jnp.pad(w, ((0, pad_in - fan_in), (0, wp - fan_out)))

    k1, k2, k3, k4, kb = jax.random.split(key, 5)
    w1 = linear_w(k1, in_dim, h1, in_p)
    w2 = linear_w(k2, h1, h2, wp)
    w3 = linear_w(k3, h2, h3, wp)
    w4 = linear_w(k4, h3, out_dim, wp)
    w_packed = jnp.concatenate([w1, w2, w3, w4], axis=0).astype(jnp.bfloat16)

    bound4 = 1.0 / (h3 ** 0.5)
    b4 = jax.random.uniform(kb, (out_dim,), jnp.float32, -bound4, bound4)
    b4 = jnp.pad(b4, (0, wp - out_dim))

    def gamma(width):
        return jnp.pad(jnp.ones((width,), jnp.float32), (0, wp - width),
                       constant_values=1.0)

    zeros = jnp.zeros((wp,), jnp.float32)
    p_packed = jnp.stack(
        [gamma(h1), zeros, gamma(h2), zeros, gamma(h3), zeros, b4, zeros],
        axis=0)
    return w_packed, p_packed


def reference_forward(x, w_packed, p_packed, out_dim):
    """Pure-JAX reference with identical numerics (bf16 matmul operands, f32
    accumulation, f32 training-mode BN) operating on the same packed params."""
    wp = w_packed.shape[1]
    in_p = w_packed.shape[0] - 3 * wp
    xp = jnp.pad(x, ((0, 0), (0, in_p - x.shape[1])))

    def dot_bf16(a, w):
        return jnp.dot(a.astype(jnp.bfloat16), w,
                       preferred_element_type=jnp.float32)

    def bn_relu(h, g, be):
        m = jnp.mean(h, axis=0, keepdims=True)
        v = jnp.mean((h - m) ** 2, axis=0, keepdims=True)
        return jnp.maximum((h - m) * jax.lax.rsqrt(v + BN_EPS) * g + be, 0.0)

    o1, o2, o3, o4 = in_p, in_p + wp, in_p + 2 * wp, in_p + 3 * wp
    h = bn_relu(dot_bf16(xp, w_packed[0:o1]), p_packed[0:1], p_packed[1:2])
    h = bn_relu(dot_bf16(h, w_packed[o1:o2]), p_packed[2:3], p_packed[3:4])
    h = bn_relu(dot_bf16(h, w_packed[o2:o3]), p_packed[4:5], p_packed[5:6])
    h = dot_bf16(h, w_packed[o3:o4]) + p_packed[6:7]
    return h[:, :out_dim]


if __name__ == "__main__":
    # Small shapes consistent with Net(in_dim, h1, h2, h3, out_dim).
    B, in_dim, h1, h2, h3, out_dim = 16, 64, 128, 96, 64, 32

    key = jax.random.PRNGKey(0)
    kx, kp = jax.random.split(key)
    x = jax.random.normal(kx, (B, in_dim), jnp.float32)
    w_packed, p_packed = init_params(kp, in_dim, h1, h2, h3, out_dim)

    out = net_forward(x, w_packed, p_packed, out_dim)
    out = jax.block_until_ready(out)

    ref = reference_forward(x, w_packed, p_packed, out_dim)
    assert out.shape == (B, out_dim)
    assert jnp.allclose(out, ref, atol=2e-3, rtol=2e-3), "mismatch vs reference"

    print("KERNEL_OK")
</pallas_src>

<mosaic_0001>
module attributes {stable_mosaic.version = 11 : i64} {
  func.func @mlp_kernel(%arg0: memref<16x128xf32, #tpu.memory_space<vmem>>, %arg1: memref<512x128xbf16, #tpu.memory_space<vmem>>, %arg2: memref<8x128xf32, #tpu.memory_space<vmem>>, %arg3: memref<16x128xf32, #tpu.memory_space<vmem>>) attributes {dimension_semantics = [], scalar_prefetch = 0 : i64, scratch_operands = 0 : i64, tpu.core_type = #tpu.core_type<tc>} {
    %c0 = arith.constant 0 : index
    %c0_0 = arith.constant 0 : index
    %0 = vector.load %arg2[%c0, %c0_0] : memref<8x128xf32, #tpu.memory_space<vmem>>, vector<1x128xf32>
    %c1 = arith.constant 1 : index
    %c0_1 = arith.constant 0 : index
    %1 = vector.load %arg2[%c1, %c0_1] : memref<8x128xf32, #tpu.memory_space<vmem>>, vector<1x128xf32>
    %c2 = arith.constant 2 : index
    %c0_2 = arith.constant 0 : index
    %2 = vector.load %arg2[%c2, %c0_2] : memref<8x128xf32, #tpu.memory_space<vmem>>, vector<1x128xf32>
    %c3 = arith.constant 3 : index
    %c0_3 = arith.constant 0 : index
    %3 = vector.load %arg2[%c3, %c0_3] : memref<8x128xf32, #tpu.memory_space<vmem>>, vector<1x128xf32>
    %c4 = arith.constant 4 : index
    %c0_4 = arith.constant 0 : index
    %4 = vector.load %arg2[%c4, %c0_4] : memref<8x128xf32, #tpu.memory_space<vmem>>, vector<1x128xf32>
    %c5 = arith.constant 5 : index
    %c0_5 = arith.constant 0 : index
    %5 = vector.load %arg2[%c5, %c0_5] : memref<8x128xf32, #tpu.memory_space<vmem>>, vector<1x128xf32>
    %c6 = arith.constant 6 : index
    %c0_6 = arith.constant 0 : index
    %6 = vector.load %arg2[%c6, %c0_6] : memref<8x128xf32, #tpu.memory_space<vmem>>, vector<1x128xf32>
    %c0_7 = arith.constant 0 : index
    %c0_8 = arith.constant 0 : index
    %7 = vector.load %arg0[%c0_7, %c0_8] : memref<16x128xf32, #tpu.memory_space<vmem>>, vector<16x128xf32>
    %8 = arith.truncf %7 : vector<16x128xf32> to vector<16x128xbf16>
    %c0_9 = arith.constant 0 : index
    %c0_10 = arith.constant 0 : index
    %9 = vector.load %arg1[%c0_9, %c0_10] : memref<512x128xbf16, #tpu.memory_space<vmem>>, vector<128x128xbf16>
    %cst = arith.constant dense<0.000000e+00> : vector<16x128xf32>
    %10 = tpu.matmul %8, %9, %cst {dimension_numbers = #tpu.dot_dimension_numbers<[1], [0], [0], [1], [0, 0, 1, 1], [], []>} : vector<16x128xbf16>, vector<128x128xbf16>, vector<16x128xf32> -> vector<16x128xf32>
    %cst_11 = arith.constant dense<0.000000e+00> : vector<128xf32>
    %11 = vector.multi_reduction <add>, %10, %cst_11 [0] : vector<16x128xf32> to vector<128xf32>
    %12 = vector.shape_cast %11 : vector<128xf32> to vector<1x128xf32>
    %cst_12 = arith.constant 1.600000e+01 : f32
    %13 = vector.broadcast %cst_12 : f32 to vector<1x128xf32>
    %14 = arith.divf %12, %13 : vector<1x128xf32>
    %15 = vector.broadcast %14 : vector<1x128xf32> to vector<16x128xf32>
    %16 = arith.subf %10, %15 : vector<16x128xf32>
    %17 = arith.mulf %16, %16 : vector<16x128xf32>
    %cst_13 = arith.constant dense<0.000000e+00> : vector<128xf32>
    %18 = vector.multi_reduction <add>, %17, %cst_13 [0] : vector<16x128xf32> to vector<128xf32>
    %19 = vector.shape_cast %18 : vector<128xf32> to vector<1x128xf32>
    %cst_14 = arith.constant 1.600000e+01 : f32
    %20 = vector.broadcast %cst_14 : f32 to vector<1x128xf32>
    %21 = arith.divf %19, %20 : vector<1x128xf32>
    %cst_15 = arith.constant 9.99999974E-6 : f32
    %22 = vector.broadcast %cst_15 : f32 to vector<1x128xf32>
    %23 = arith.addf %21, %22 : vector<1x128xf32>
    %24 = math.rsqrt %23 : vector<1x128xf32>
    %25 = arith.mulf %24, %0 : vector<1x128xf32>
    %26 = arith.mulf %14, %25 : vector<1x128xf32>
    %27 = arith.subf %1, %26 : vector<1x128xf32>
    %28 = vector.broadcast %25 : vector<1x128xf32> to vector<16x128xf32>
    %29 = arith.mulf %10, %28 : vector<16x128xf32>
    %30 = vector.broadcast %27 : vector<1x128xf32> to vector<16x128xf32>
    %31 = arith.addf %29, %30 : vector<16x128xf32>
    %cst_16 = arith.constant 0.000000e+00 : f32
    %32 = vector.broadcast %cst_16 : f32 to vector<16x128xf32>
    %33 = arith.maximumf %31, %32 : vector<16x128xf32>
    %34 = arith.truncf %33 : vector<16x128xf32> to vector<16x128xbf16>
    %c128 = arith.constant 128 : index
    %c0_17 = arith.constant 0 : index
    %35 = vector.load %arg1[%c128, %c0_17] : memref<512x128xbf16, #tpu.memory_space<vmem>>, vector<128x128xbf16>
    %cst_18 = arith.constant dense<0.000000e+00> : vector<16x128xf32>
    %36 = tpu.matmul %34, %35, %cst_18 {dimension_numbers = #tpu.dot_dimension_numbers<[1], [0], [0], [1], [0, 0, 1, 1], [], []>} : vector<16x128xbf16>, vector<128x128xbf16>, vector<16x128xf32> -> vector<16x128xf32>
    %cst_19 = arith.constant dense<0.000000e+00> : vector<128xf32>
    %37 = vector.multi_reduction <add>, %36, %cst_19 [0] : vector<16x128xf32> to vector<128xf32>
    %38 = vector.shape_cast %37 : vector<128xf32> to vector<1x128xf32>
    %cst_20 = arith.constant 1.600000e+01 : f32
    %39 = vector.broadcast %cst_20 : f32 to vector<1x128xf32>
    %40 = arith.divf %38, %39 : vector<1x128xf32>
    %41 = vector.broadcast %40 : vector<1x128xf32> to vector<16x128xf32>
    %42 = arith.subf %36, %41 : vector<16x128xf32>
    %43 = arith.mulf %42, %42 : vector<16x128xf32>
    %cst_21 = arith.constant dense<0.000000e+00> : vector<128xf32>
    %44 = vector.multi_reduction <add>, %43, %cst_21 [0] : vector<16x128xf32> to vector<128xf32>
    %45 = vector.shape_cast %44 : vector<128xf32> to vector<1x128xf32>
    %cst_22 = arith.constant 1.600000e+01 : f32
    %46 = vector.broadcast %cst_22 : f32 to vector<1x128xf32>
    %47 = arith.divf %45, %46 : vector<1x128xf32>
    %cst_23 = arith.constant 9.99999974E-6 : f32
    %48 = vector.broadcast %cst_23 : f32 to vector<1x128xf32>
    %49 = arith.addf %47, %48 : vector<1x128xf32>
    %50 = math.rsqrt %49 : vector<1x128xf32>
    %51 = arith.mulf %50, %2 : vector<1x128xf32>
    %52 = arith.mulf %40, %51 : vector<1x128xf32>
    %53 = arith.subf %3, %52 : vector<1x128xf32>
    %54 = vector.broadcast %51 : vector<1x128xf32> to vector<16x128xf32>
    %55 = arith.mulf %36, %54 : vector<16x128xf32>
    %56 = vector.broadcast %53 : vector<1x128xf32> to vector<16x128xf32>
    %57 = arith.addf %55, %56 : vector<16x128xf32>
    %cst_24 = arith.constant 0.000000e+00 : f32
    %58 = vector.broadcast %cst_24 : f32 to vector<16x128xf32>
    %59 = arith.maximumf %57, %58 : vector<16x128xf32>
    %60 = arith.truncf %59 : vector<16x128xf32> to vector<16x128xbf16>
    %c256 = arith.constant 256 : index
    %c0_25 = arith.constant 0 : index
    %61 = vector.load %arg1[%c256, %c0_25] : memref<512x128xbf16, #tpu.memory_space<vmem>>, vector<128x128xbf16>
    %cst_26 = arith.constant dense<0.000000e+00> : vector<16x128xf32>
    %62 = tpu.matmul %60, %61, %cst_26 {dimension_numbers = #tpu.dot_dimension_numbers<[1], [0], [0], [1], [0, 0, 1, 1], [], []>} : vector<16x128xbf16>, vector<128x128xbf16>, vector<16x128xf32> -> vector<16x128xf32>
    %cst_27 = arith.constant dense<0.000000e+00> : vector<128xf32>
    %63 = vector.multi_reduction <add>, %62, %cst_27 [0] : vector<16x128xf32> to vector<128xf32>
    %64 = vector.shape_cast %63 : vector<128xf32> to vector<1x128xf32>
    %cst_28 = arith.constant 1.600000e+01 : f32
    %65 = vector.broadcast %cst_28 : f32 to vector<1x128xf32>
    %66 = arith.divf %64, %65 : vector<1x128xf32>
    %67 = vector.broadcast %66 : vector<1x128xf32> to vector<16x128xf32>
    %68 = arith.subf %62, %67 : vector<16x128xf32>
    %69 = arith.mulf %68, %68 : vector<16x128xf32>
    %cst_29 = arith.constant dense<0.000000e+00> : vector<128xf32>
    %70 = vector.multi_reduction <add>, %69, %cst_29 [0] : vector<16x128xf32> to vector<128xf32>
    %71 = vector.shape_cast %70 : vector<128xf32> to vector<1x128xf32>
    %cst_30 = arith.constant 1.600000e+01 : f32
    %72 = vector.broadcast %cst_30 : f32 to vector<1x128xf32>
    %73 = arith.divf %71, %72 : vector<1x128xf32>
    %cst_31 = arith.constant 9.99999974E-6 : f32
    %74 = vector.broadcast %cst_31 : f32 to vector<1x128xf32>
    %75 = arith.addf %73, %74 : vector<1x128xf32>
    %76 = math.rsqrt %75 : vector<1x128xf32>
    %77 = arith.mulf %76, %4 : vector<1x128xf32>
    %78 = arith.mulf %66, %77 : vector<1x128xf32>
    %79 = arith.subf %5, %78 : vector<1x128xf32>
    %80 = vector.broadcast %77 : vector<1x128xf32> to vector<16x128xf32>
    %81 = arith.mulf %62, %80 : vector<16x128xf32>
    %82 = vector.broadcast %79 : vector<1x128xf32> to vector<16x128xf32>
    %83 = arith.addf %81, %82 : vector<16x128xf32>
    %cst_32 = arith.constant 0.000000e+00 : f32
    %84 = vector.broadcast %cst_32 : f32 to vector<16x128xf32>
    %85 = arith.maximumf %83, %84 : vector<16x128xf32>
    %86 = arith.truncf %85 : vector<16x128xf32> to vector<16x128xbf16>
    %c384 = arith.constant 384 : index
    %c0_33 = arith.constant 0 : index
    %87 = vector.load %arg1[%c384, %c0_33] : memref<512x128xbf16, #tpu.memory_space<vmem>>, vector<128x128xbf16>
    %cst_34 = arith.constant dense<0.000000e+00> : vector<16x128xf32>
    %88 = tpu.matmul %86, %87, %cst_34 {dimension_numbers = #tpu.dot_dimension_numbers<[1], [0], [0], [1], [0, 0, 1, 1], [], []>} : vector<16x128xbf16>, vector<128x128xbf16>, vector<16x128xf32> -> vector<16x128xf32>
    %89 = vector.broadcast %6 : vector<1x128xf32> to vector<16x128xf32>
    %90 = arith.addf %88, %89 : vector<16x128xf32>
    %c0_35 = arith.constant 0 : index
    %c0_36 = arith.constant 0 : index
    %91 = vector.load %arg3[%c0_35, %c0_36] : memref<16x128xf32, #tpu.memory_space<vmem>>, vector<16x128xf32>
    tpu.vector_store %arg3[%c0_35, %c0_36], %90 {strides = array<i32>} : memref<16x128xf32, #tpu.memory_space<vmem>>, vector<16x128xf32>,
    return
  }
}

</mosaic_0001>

<llo_original>
// kernel: net_forward.1
$region0: #{net_forward.1}
  #allocation0 [shape = 'u32[]', space=smem, size = 0x4, offset = 0x4, fixed_abs, tag = 'smem constant byte address 0x4 - core index']
  #allocation1 [shape = 'u32[72,128]{1,0:T(1,128)}', space=vmem, size = 0x9000, scoped, tag = 'internal scratch']
  %s0 = inlined_call_operand.vmem [shape: f32[16,128], index: 0, kind: input, shape index: {}]
  %s1 = inlined_call_operand.hbm [shape: bf16[512,128], index: 1, kind: input, shape index: {}]
  %s2 = inlined_call_operand.vmem [shape: f32[8,128], index: 2, kind: input, shape index: {}]
  %s3 = inlined_call_operand.hbm [shape: f32[16,128], index: 3, kind: output, shape index: {}]
  %s4 = sld [smem:[#allocation0]]
  $region26: #{net_forward.1} parent=0
    _
  %s6 = ssub.s32 1, %s4
  %s7 = scalar_select 0, %s6, %s4
  $region1: #{net_forward.1} parent=0
    #allocation2 [shape = 'u8[131072]{0}', space=vmem, size = 0x20000, scoped, tag = 'input window, operand 1, single buffered']
    #allocation3 [shape = 's32[1]{0}', space=sflag, size = 0x4, scoped, tag = 'scoped memory for net_forward.1']
    #allocation4 [shape = 's32[1]{0}', space=sflag, size = 0x4, scoped, tag = 'scoped memory for net_forward.1']
    #allocation5 [shape = 'u8[8192]{0}', space=vmem, size = 0x2000, scoped, tag = 'output window, operand 0, single buffered']
    %8 = vsyncpa [#allocation3], 0
    %9 = vsyncpa [#allocation4], 0
    // Predicated region
    $region2: #{net_forward.1} parent=1 // pred_check
      _
    $region3: #{net_forward.1} parent=1 // pred_check_branch
      %11 = sbr.rel (0) target = $region5
    $region4: #{net_forward.1} parent=1 // pred_region
      _
    $region5: #{net_forward.1} parent=1 // pred_fallthru
      _
    // Predicated region
    $region6: #{net_forward.1} parent=1 // pred_check
      _
    $region7: #{net_forward.1} parent=1 // pred_check_branch
      %13 = sbr.rel (0) target = $region9
    $region8: #{net_forward.1} parent=1 // pred_region
      %15 = vsyncadd [#allocation3], 0
      %s16 = sshll.u32 %s1, 4
      %s17 = int_to_ptr.hbm [resolvable:$true] %s16
      %s18 = sshll.u32 [#allocation2], 4
      %s19 = int_to_ptr.vmem [resolvable:$true] %s18
      %24 = dma.hbm_to_vmem [thread:$0]  %s17, 4096, %s19, [#allocation3], 64, 64, 4
    $region9: #{net_forward.1} parent=1 // pred_fallthru
      _
    // Predicated region
    $region10: #{net_forward.1} parent=1 // pred_check
      _
    $region11: #{net_forward.1} parent=1 // pred_check_branch
      %26 = sbr.rel (0) target = $region13
    $region12: #{net_forward.1} parent=1 // pred_region
      _
    $region13: #{net_forward.1} parent=1 // pred_fallthru
      _
    // Predicated region
    $region14: #{net_forward.1} parent=1 // pred_check
      _
    $region15: #{net_forward.1} parent=1 // pred_check_branch
      %28 = sbr.rel (0) target = $region17
    $region16: #{net_forward.1} parent=1 // pred_region
      %30 = dma.done [#allocation3], 4096
    $region17: #{net_forward.1} parent=1 // pred_fallthru
      _
    %v31 = vld [vmem:[%s2] sm:$0x1]
    %v32 = vld [vmem:[%s2 + $0x1] sm:$0x1]
    %v33 = vld [vmem:[%s2 + $0x2] sm:$0x1]
    %v34 = vld [vmem:[%s2 + $0x3] sm:$0x1]
    %v35 = vld [vmem:[%s2 + $0x4] sm:$0x1]
    %v36 = vld [vmem:[%s2 + $0x5] sm:$0x1]
    %v37 = vld [vmem:[%s2 + $0x6] sm:$0x1]
    %v38 = vld [vmem:[%s0] sm:$0xff]
    %v39 = vld [vmem:[%s0 + $0x8] sm:$0xff]
    %v40 = vpack.c.bf16 %v39, %v38
    %v41 = vld [vmem:[#allocation2] sm:$0xf]
    %v42 = vld [vmem:[#allocation2 + $0x4] sm:$0xf]
    %v43 = vld [vmem:[#allocation2 + $0x8] sm:$0xf]
    %v44 = vld [vmem:[#allocation2 + $0xc] sm:$0xf]
    %v45 = vld [vmem:[#allocation2 + $0x10] sm:$0xf]
    %v46 = vld [vmem:[#allocation2 + $0x14] sm:$0xf]
    %v47 = vld [vmem:[#allocation2 + $0x18] sm:$0xf]
    %v48 = vld [vmem:[#allocation2 + $0x1c] sm:$0xf]
    %v49 = vld [vmem:[#allocation2 + $0x20] sm:$0xf]
    %v50 = vld [vmem:[#allocation2 + $0x24] sm:$0xf]
    %v51 = vld [vmem:[#allocation2 + $0x28] sm:$0xf]
    %v52 = vld [vmem:[#allocation2 + $0x2c] sm:$0xf]
    %v53 = vld [vmem:[#allocation2 + $0x30] sm:$0xf]
    %v54 = vld [vmem:[#allocation2 + $0x34] sm:$0xf]
    %v55 = vld [vmem:[#allocation2 + $0x38] sm:$0xf]
    %v56 = vld [vmem:[#allocation2 + $0x3c] sm:$0xf]
    %v73 = vunpack.c.l.b16 %v41
    %v74 = vunpack.c.l.b16 %v42
    %v75 = vunpack.c.l.b16 %v43
    %v76 = vunpack.c.l.b16 %v44
    %v77 = vunpack.c.l.b16 %v45
    %v78 = vunpack.c.l.b16 %v46
    %v79 = vunpack.c.l.b16 %v47
    %v80 = vunpack.c.l.b16 %v48
    %v81 = vunpack.c.l.b16 %v49
    %v82 = vunpack.c.l.b16 %v50
    %v83 = vunpack.c.l.b16 %v51
    %v84 = vunpack.c.l.b16 %v52
    %v85 = vunpack.c.l.b16 %v53
    %v86 = vunpack.c.l.b16 %v54
    %v87 = vunpack.c.l.b16 %v55
    %v88 = vunpack.c.l.b16 %v56
    %v89 = vpack.c.b16 %v74, %v73
    %v90 = vpack.c.b16 %v76, %v75
    %v91 = vpack.c.b16 %v78, %v77
    %v92 = vpack.c.b16 %v80, %v79
    %v93 = vpack.c.b16 %v82, %v81
    %v94 = vpack.c.b16 %v84, %v83
    %v95 = vpack.c.b16 %v86, %v85
    %v96 = vpack.c.b16 %v88, %v87
    %105 = vmatpush.bf16.msra.mxu0 %v96
    %106 = vmatpush.bf16.msra.mxu0 %v95
    %107 = vmatpush.bf16.msra.mxu0 %v94
    %108 = vmatpush.bf16.msra.mxu0 %v93
    %109 = vmatpush.bf16.msra.mxu0 %v92
    %110 = vmatpush.bf16.msra.mxu0 %v91
    %111 = vmatpush.bf16.msra.mxu0 %v90
    %112 = vmatpush.bf16.msra.mxu0 %v89
    %113 = vmatmul.bf16.gmra.mxu0 %v40
    %v114 = vpop.f32.mrf.mxu0
    %v115 = vadd.f32 0.0, %v114
    %v116 = vpop.f32.mrf.mxu0
    %v117 = vadd.f32 0.0, %v116
    %118 = vdwg.mxu0
    %v119 = vadd.f32 %v115, %v117
    %v120 = vrot.slane %v119, 4
    %v121 = vadd.f32 %v119, %v120
    %v122 = vrot.slane %v121, 2
    %v123 = vadd.f32 %v121, %v122
    %v124 = vrot.slane %v123, 1
    %v125 = vadd.f32 %v123, %v124
    %v126 = vrcp.pop 16.0
    %v127 = vmul.f32 16.0, %v126
    %v128 = vsub.f32 1.0, %v127
    %v129 = vmul.f32 %v126, %v128
    %v130 = vadd.f32 %v126, %v129
    %vm131 = vweird.f32 %v126
    %v132 = vsel %vm131, %v126, %v130
    %v133 = vmul.f32 %v125, %v132
    %v134 = vsub.f32 %v115, %v133
    %v135 = vsub.f32 %v117, %v133
    %v136 = vmul.f32 %v134, %v134
    %v137 = vmul.f32 %v135, %v135
    %v138 = vadd.f32 %v136, %v137
    %v139 = vrot.slane %v138, 4
    %v140 = vadd.f32 %v138, %v139
    %v141 = vrot.slane %v140, 2
    %v142 = vadd.f32 %v140, %v141
    %v143 = vrot.slane %v142, 1
    %v144 = vadd.f32 %v142, %v143
    %v145 = vmul.f32 %v144, %v132
    %v146 = vadd.f32 %v145, 1e-05
    %v147 = vrsqrt.pop %v146
    %v148 = vmul.f32 %v147, %v146
    %v149 = vmul.f32 %v148, %v147
    %v150 = vmul.f32 0.5, %v149
    %v151 = vsub.f32 1.5, %v150
    %v152 = vmul.f32 %v147, %v151
    %vm153 = vweird.f32 %v146
    %vm154 = vweird.f32 %v147
    %vm155 = vmor %vm153, %vm154
    %v156 = vsel %vm155, %v147, %v152
    %v157 = vmul.f32 %v156, %v31
    %v158 = vmul.f32 %v133, %v157
    %v159 = vsub.f32 %v32, %v158
    %v160 = vperm.slane %v157, 0
    %v161 = vmul.f32 %v115, %v160
    %v162 = vmul.f32 %v117, %v160
    %v163 = vperm.slane %v159, 0
    %v164 = vadd.f32 %v161, %v163
    %v165 = vadd.f32 %v162, %v163
    %v166 = vmax.f32 %v164, 0.0
    %v167 = vmax.f32 %v165, 0.0
    %v168 = vpack.c.bf16 %v167, %v166
    %v169 = vld [vmem:[#allocation2 + $0x40] sm:$0xf]
    %v170 = vld [vmem:[#allocation2 + $0x44] sm:$0xf]
    %v171 = vld [vmem:[#allocation2 + $0x48] sm:$0xf]
    %v172 = vld [vmem:[#allocation2 + $0x4c] sm:$0xf]
    %v173 = vld [vmem:[#allocation2 + $0x50] sm:$0xf]
    %v174 = vld [vmem:[#allocation2 + $0x54] sm:$0xf]
    %v175 = vld [vmem:[#allocation2 + $0x58] sm:$0xf]
    %v176 = vld [vmem:[#allocation2 + $0x5c] sm:$0xf]
    %v177 = vld [vmem:[#allocation2 + $0x60] sm:$0xf]
    %v178 = vld [vmem:[#allocation2 + $0x64] sm:$0xf]
    %v179 = vld [vmem:[#allocation2 + $0x68] sm:$0xf]
    %v180 = vld [vmem:[#allocation2 + $0x6c] sm:$0xf]
    %v181 = vld [vmem:[#allocation2 + $0x70] sm:$0xf]
    %v182 = vld [vmem:[#allocation2 + $0x74] sm:$0xf]
    %v183 = vld [vmem:[#allocation2 + $0x78] sm:$0xf]
    %v184 = vld [vmem:[#allocation2 + $0x7c] sm:$0xf]
    %v201 = vunpack.c.l.b16 %v169
    %v202 = vunpack.c.l.b16 %v170
    %v203 = vunpack.c.l.b16 %v171
    %v204 = vunpack.c.l.b16 %v172
    %v205 = vunpack.c.l.b16 %v173
    %v206 = vunpack.c.l.b16 %v174
    %v207 = vunpack.c.l.b16 %v175
    %v208 = vunpack.c.l.b16 %v176
    %v209 = vunpack.c.l.b16 %v177
    %v210 = vunpack.c.l.b16 %v178
    %v211 = vunpack.c.l.b16 %v179
    %v212 = vunpack.c.l.b16 %v180
    %v213 = vunpack.c.l.b16 %v181
    %v214 = vunpack.c.l.b16 %v182
    %v215 = vunpack.c.l.b16 %v183
    %v216 = vunpack.c.l.b16 %v184
    %v217 = vpack.c.b16 %v202, %v201
    %v218 = vpack.c.b16 %v204, %v203
    %v219 = vpack.c.b16 %v206, %v205
    %v220 = vpack.c.b16 %v208, %v207
    %v221 = vpack.c.b16 %v210, %v209
    %v222 = vpack.c.b16 %v212, %v211
    %v223 = vpack.c.b16 %v214, %v213
    %v224 = vpack.c.b16 %v216, %v215
    %233 = vmatpush.bf16.msra.mxu0 %v224
    %234 = vmatpush.bf16.msra.mxu0 %v223
    %235 = vmatpush.bf16.msra.mxu0 %v222
    %236 = vmatpush.bf16.msra.mxu0 %v221
    %237 = vmatpush.bf16.msra.mxu0 %v220
    %238 = vmatpush.bf16.msra.mxu0 %v219
    %239 = vmatpush.bf16.msra.mxu0 %v218
    %240 = vmatpush.bf16.msra.mxu0 %v217
    %241 = vmatmul.bf16.gmra.mxu0 %v168
    %v242 = vpop.f32.mrf.mxu0
    %v243 = vadd.f32 0.0, %v242
    %v244 = vpop.f32.mrf.mxu0
    %v245 = vadd.f32 0.0, %v244
    %246 = vdwg.mxu0
    %v247 = vadd.f32 %v243, %v245
    %v248 = vrot.slane %v247, 4
    %v249 = vadd.f32 %v247, %v248
    %v250 = vrot.slane %v249, 2
    %v251 = vadd.f32 %v249, %v250
    %v252 = vrot.slane %v251, 1
    %v253 = vadd.f32 %v251, %v252
    %v254 = vmul.f32 %v253, %v132
    %v255 = vsub.f32 %v243, %v254
    %v256 = vsub.f32 %v245, %v254
    %v257 = vmul.f32 %v255, %v255
    %v258 = vmul.f32 %v256, %v256
    %v259 = vadd.f32 %v257, %v258
    %v260 = vrot.slane %v259, 4
    %v261 = vadd.f32 %v259, %v260
    %v262 = vrot.slane %v261, 2
    %v263 = vadd.f32 %v261, %v262
    %v264 = vrot.slane %v263, 1
    %v265 = vadd.f32 %v263, %v264
    %v266 = vmul.f32 %v265, %v132
    %v267 = vadd.f32 %v266, 1e-05
    %v268 = vrsqrt.pop %v267
    %v269 = vmul.f32 %v268, %v267
    %v270 = vmul.f32 %v269, %v268
    %v271 = vmul.f32 0.5, %v270
    %v272 = vsub.f32 1.5, %v271
    %v273 = vmul.f32 %v268, %v272
    %vm274 = vweird.f32 %v267
    %vm275 = vweird.f32 %v268
    %vm276 = vmor %vm274, %vm275
    %v277 = vsel %vm276, %v268, %v273
    %v278 = vmul.f32 %v277, %v33
    %v279 = vmul.f32 %v254, %v278
    %v280 = vsub.f32 %v34, %v279
    %v281 = vperm.slane %v278, 0
    %v282 = vmul.f32 %v243, %v281
    %v283 = vmul.f32 %v245, %v281
    %v284 = vperm.slane %v280, 0
    %v285 = vadd.f32 %v282, %v284
    %v286 = vadd.f32 %v283, %v284
    %v287 = vmax.f32 %v285, 0.0
    %v288 = vmax.f32 %v286, 0.0
    %v289 = vpack.c.bf16 %v288, %v287
    %v290 = vld [vmem:[#allocation2 + $0x80] sm:$0xf]
    %v291 = vld [vmem:[#allocation2 + $0x84] sm:$0xf]
    %v292 = vld [vmem:[#allocation2 + $0x88] sm:$0xf]
    %v293 = vld [vmem:[#allocation2 + $0x8c] sm:$0xf]
    %v294 = vld [vmem:[#allocation2 + $0x90] sm:$0xf]
    %v295 = vld [vmem:[#allocation2 + $0x94] sm:$0xf]
    %v296 = vld [vmem:[#allocation2 + $0x98] sm:$0xf]
    %v297 = vld [vmem:[#allocation2 + $0x9c] sm:$0xf]
    %v298 = vld [vmem:[#allocation2 + $0xa0] sm:$0xf]
    %v299 = vld [vmem:[#allocation2 + $0xa4] sm:$0xf]
    %v300 = vld [vmem:[#allocation2 + $0xa8] sm:$0xf]
    %v301 = vld [vmem:[#allocation2 + $0xac] sm:$0xf]
    %v302 = vld [vmem:[#allocation2 + $0xb0] sm:$0xf]
    %v303 = vld [vmem:[#allocation2 + $0xb4] sm:$0xf]
    %v304 = vld [vmem:[#allocation2 + $0xb8] sm:$0xf]
    %v305 = vld [vmem:[#allocation2 + $0xbc] sm:$0xf]
    %v322 = vunpack.c.l.b16 %v290
    %v323 = vunpack.c.l.b16 %v291
    %v324 = vunpack.c.l.b16 %v292
    %v325 = vunpack.c.l.b16 %v293
    %v326 = vunpack.c.l.b16 %v294
    %v327 = vunpack.c.l.b16 %v295
    %v328 = vunpack.c.l.b16 %v296
    %v329 = vunpack.c.l.b16 %v297
    %v330 = vunpack.c.l.b16 %v298
    %v331 = vunpack.c.l.b16 %v299
    %v332 = vunpack.c.l.b16 %v300
    %v333 = vunpack.c.l.b16 %v301
    %v334 = vunpack.c.l.b16 %v302
    %v335 = vunpack.c.l.b16 %v303
    %v336 = vunpack.c.l.b16 %v304
    %v337 = vunpack.c.l.b16 %v305
    %v338 = vpack.c.b16 %v323, %v322
    %v339 = vpack.c.b16 %v325, %v324
    %v340 = vpack.c.b16 %v327, %v326
    %v341 = vpack.c.b16 %v329, %v328
    %v342 = vpack.c.b16 %v331, %v330
    %v343 = vpack.c.b16 %v333, %v332
    %v344 = vpack.c.b16 %v335, %v334
    %v345 = vpack.c.b16 %v337, %v336
    %354 = vmatpush.bf16.msra.mxu0 %v345
    %355 = vmatpush.bf16.msra.mxu0 %v344
    %356 = vmatpush.bf16.msra.mxu0 %v343
    %357 = vmatpush.bf16.msra.mxu0 %v342
    %358 = vmatpush.bf16.msra.mxu0 %v341
    %359 = vmatpush.bf16.msra.mxu0 %v340
    %360 = vmatpush.bf16.msra.mxu0 %v339
    %361 = vmatpush.bf16.msra.mxu0 %v338
    %362 = vmatmul.bf16.gmra.mxu0 %v289
    %v363 = vpop.f32.mrf.mxu0
    %v364 = vadd.f32 0.0, %v363
    %v365 = vpop.f32.mrf.mxu0
    %v366 = vadd.f32 0.0, %v365
    %367 = vdwg.mxu0
    %v368 = vadd.f32 %v364, %v366
    %v369 = vrot.slane %v368, 4
    %v370 = vadd.f32 %v368, %v369
    %v371 = vrot.slane %v370, 2
    %v372 = vadd.f32 %v370, %v371
    %v373 = vrot.slane %v372, 1
    %v374 = vadd.f32 %v372, %v373
    %v375 = vmul.f32 %v374, %v132
    %v376 = vsub.f32 %v364, %v375
    %v377 = vsub.f32 %v366, %v375
    %v378 = vmul.f32 %v376, %v376
    %v379 = vmul.f32 %v377, %v377
    %v380 = vadd.f32 %v378, %v379
    %v381 = vrot.slane %v380, 4
    %v382 = vadd.f32 %v380, %v381
    %v383 = vrot.slane %v382, 2
    %v384 = vadd.f32 %v382, %v383
    %v385 = vrot.slane %v384, 1
    %v386 = vadd.f32 %v384, %v385
    %v387 = vmul.f32 %v386, %v132
    %v388 = vadd.f32 %v387, 1e-05
    %v389 = vrsqrt.pop %v388
    %v390 = vmul.f32 %v389, %v388
    %v391 = vmul.f32 %v390, %v389
    %v392 = vmul.f32 0.5, %v391
    %v393 = vsub.f32 1.5, %v392
    %v394 = vmul.f32 %v389, %v393
    %vm395 = vweird.f32 %v388
    %vm396 = vweird.f32 %v389
    %vm397 = vmor %vm395, %vm396
    %v398 = vsel %vm397, %v389, %v394
    %v399 = vmul.f32 %v398, %v35
    %v400 = vmul.f32 %v375, %v399
    %v401 = vsub.f32 %v36, %v400
    %v402 = vperm.slane %v399, 0
    %v403 = vmul.f32 %v364, %v402
    %v404 = vmul.f32 %v366, %v402
    %v405 = vperm.slane %v401, 0
    %v406 = vadd.f32 %v403, %v405
    %v407 = vadd.f32 %v404, %v405
    %v408 = vmax.f32 %v406, 0.0
    %v409 = vmax.f32 %v407, 0.0
    %v410 = vpack.c.bf16 %v409, %v408
    %v411 = vld [vmem:[#allocation2 + $0xc0] sm:$0xf]
    %v412 = vld [vmem:[#allocation2 + $0xc4] sm:$0xf]
    %v413 = vld [vmem:[#allocation2 + $0xc8] sm:$0xf]
    %v414 = vld [vmem:[#allocation2 + $0xcc] sm:$0xf]
    %v415 = vld [vmem:[#allocation2 + $0xd0] sm:$0xf]
    %v416 = vld [vmem:[#allocation2 + $0xd4] sm:$0xf]
    %v417 = vld [vmem:[#allocation2 + $0xd8] sm:$0xf]
    %v418 = vld [vmem:[#allocation2 + $0xdc] sm:$0xf]
    %v419 = vld [vmem:[#allocation2 + $0xe0] sm:$0xf]
    %v420 = vld [vmem:[#allocation2 + $0xe4] sm:$0xf]
    %v421 = vld [vmem:[#allocation2 + $0xe8] sm:$0xf]
    %v422 = vld [vmem:[#allocation2 + $0xec] sm:$0xf]
    %v423 = vld [vmem:[#allocation2 + $0xf0] sm:$0xf]
    %v424 = vld [vmem:[#allocation2 + $0xf4] sm:$0xf]
    %v425 = vld [vmem:[#allocation2 + $0xf8] sm:$0xf]
    %v426 = vld [vmem:[#allocation2 + $0xfc] sm:$0xf]
    %v427 = vperm.slane %v37, 0
    %v444 = vunpack.c.l.b16 %v411
    %v445 = vunpack.c.l.b16 %v412
    %v446 = vunpack.c.l.b16 %v413
    %v447 = vunpack.c.l.b16 %v414
    %v448 = vunpack.c.l.b16 %v415
    %v449 = vunpack.c.l.b16 %v416
    %v450 = vunpack.c.l.b16 %v417
    %v451 = vunpack.c.l.b16 %v418
    %v452 = vunpack.c.l.b16 %v419
    %v453 = vunpack.c.l.b16 %v420
    %v454 = vunpack.c.l.b16 %v421
    %v455 = vunpack.c.l.b16 %v422
    %v456 = vunpack.c.l.b16 %v423
    %v457 = vunpack.c.l.b16 %v424
    %v458 = vunpack.c.l.b16 %v425
    %v459 = vunpack.c.l.b16 %v426
    %v460 = vpack.c.b16 %v445, %v444
    %v461 = vpack.c.b16 %v447, %v446
    %v462 = vpack.c.b16 %v449, %v448
    %v463 = vpack.c.b16 %v451, %v450
    %v464 = vpack.c.b16 %v453, %v452
    %v465 = vpack.c.b16 %v455, %v454
    %v466 = vpack.c.b16 %v457, %v456
    %v467 = vpack.c.b16 %v459, %v458
    %476 = vmatpush.bf16.msra.mxu0 %v467
    %477 = vmatpush.bf16.msra.mxu0 %v466
    %478 = vmatpush.bf16.msra.mxu0 %v465
    %479 = vmatpush.bf16.msra.mxu0 %v464
    %480 = vmatpush.bf16.msra.mxu0 %v463
    %481 = vmatpush.bf16.msra.mxu0 %v462
    %482 = vmatpush.bf16.msra.mxu0 %v461
    %483 = vmatpush.bf16.msra.mxu0 %v460
    %484 = vmatmul.bf16.gmra.mxu0 %v410
    %v485 = vpop.f32.mrf.mxu0
    %v486 = vadd.f32 %v427, %v485
    %v487 = vpop.f32.mrf.mxu0
    %v488 = vadd.f32 %v427, %v487
    %489 = vdwg.mxu0
    %490 = vst [vmem:[#allocation5] sm:$0xff] %v486
    %491 = vst [vmem:[#allocation5 + $0x8] sm:$0xff] %v488
    // Predicated region
    $region18: #{net_forward.1} parent=1 // pred_check
      _
    $region19: #{net_forward.1} parent=1 // pred_check_branch
      %493 = sbr.rel (0) target = $region21
    $region20: #{net_forward.1} parent=1 // pred_region
      %495 = vsyncadd [#allocation4], 0
      %s496 = sshll.u32 [#allocation5], 4
      %s497 = int_to_ptr.vmem [resolvable:$true] %s496
      %s498 = sshll.u32 %s3, 4
      %s499 = int_to_ptr.hbm [resolvable:$true] %s498
      %504 = dma.vmem_to_hbm [thread:$0]  %s497, 256, %s499, [#allocation4], 128, 128, 8
    $region21: #{net_forward.1} parent=1 // pred_fallthru
      _
    // Predicated region
    $region22: #{net_forward.1} parent=1 // pred_check
      _
    $region23: #{net_forward.1} parent=1 // pred_check_branch
      %506 = sbr.rel (0) target = $region25
    $region24: #{net_forward.1} parent=1 // pred_region
      %508 = dma.done [#allocation4], 256
    $region25: #{net_forward.1} parent=1 // pred_fallthru
      _
    %509 = vsyncpa [#allocation3], 1
    %510 = vsyncpa [#allocation4], 1

</llo_original>
